<compile_context>
chip_gen: v6e
topology: v6e:2x2x1
jax: 0.10.0
libtpu: 0.0.40
codegen_flags: <defaults>
</compile_context>

<pallas_src>
import jax
import jax.numpy as jnp
from jax.experimental import pallas as pl
from jax.experimental.pallas import tpu as pltpu


_SUBLANES = 8
_LANES = 128


def _round_up(n, m):
    return ((n + m - 1) // m) * m


def _mix_kernel(perm_ref, coeffs_ref, x_ref, xp_ref, o_ref):
    # perm_ref / coeffs_ref live in SMEM (scalar prefetch).
    i = pl.program_id(0)
    c = coeffs_ref[i]                              # scalar f32
    x = x_ref[...]
    xp = xp_ref[...]
    # o = xp + c*(x - xp)  ==  c*x + (1-c)*xp, fewer VPU ops / live vregs.
    o_ref[...] = (xp + c * (x - xp)).astype(o_ref.dtype)


def mixup_x(x, coeffs, perm, *, target_block_bytes=2 * 1024 * 1024):
    """x: (B, ...) any rank; coeffs: (B,) f32; perm: (B,) i32 -> mixed x."""
    orig_shape = x.shape
    B = orig_shape[0]
    N = 1
    for d in orig_shape[1:]:
        N *= d

    itemsize = jnp.dtype(x.dtype).itemsize
    # Lane-tile (last block dim): multiple of 128, capped so that
    # 6 * block_bytes stays ~<= 12 MiB (fits v5e's 16 MiB default scoped VMEM,
    # v6e 32 MiB, v7x 64 MiB physical).
    tf_cap = max(_LANES,
                 (target_block_bytes // (_SUBLANES * itemsize)) // _LANES * _LANES)
    lanes_needed = _round_up(pl.cdiv(N, _SUBLANES), _LANES)
    TF = min(tf_cap, lanes_needed)
    Lpr = _round_up(lanes_needed, TF)              # per-row lane extent
    N_pad = _SUBLANES * Lpr
    n_tiles = Lpr // TF

    x_flat = x.reshape(B, N)
    if N_pad != N:
        x_flat = jnp.pad(x_flat, ((0, 0), (0, N_pad - N)))
    x3 = x_flat.reshape(B, _SUBLANES, Lpr)         # sublane-full, lane-dense

    block = (1, _SUBLANES, TF)
    out = pl.pallas_call(
        _mix_kernel,
        out_shape=jax.ShapeDtypeStruct((B, _SUBLANES, Lpr), x.dtype),
        grid_spec=pltpu.PrefetchScalarGridSpec(
            num_scalar_prefetch=2,                 # perm, coeffs
            grid=(B, n_tiles),
            in_specs=[
                # x[i]
                pl.BlockSpec(block, lambda i, j, perm, coeffs: (i, 0, j)),
                # x[perm[i]] -- data-dependent block index via scalar prefetch
                pl.BlockSpec(block, lambda i, j, perm, coeffs: (perm[i], 0, j)),
            ],
            out_specs=pl.BlockSpec(block, lambda i, j, perm, coeffs: (i, 0, j)),
        ),
        compiler_params=pltpu.CompilerParams(
            # Both axes independent -> shard across v7x's 2 TensorCores.
            dimension_semantics=("parallel", "parallel"),
            vmem_limit_bytes=32 * 1024 * 1024,
        ),
    )(perm, coeffs, x3, x3)

    out_flat = out.reshape(B, N_pad)
    if N_pad != N:
        out_flat = out_flat[:, :N]
    return out_flat.reshape(orig_shape)


def separate_multi_mixup(key, x, cls_labels, reg_labels, cls_masks, reg_masks,
                         mix_beta=0.5):
    """Functional equivalent of SeparateMultiMixup.forward.

    RNG (randperm + Beta rsample) is done with jax.random; there is no
    in-kernel equivalent of torch.distributions.Beta needed for the hot path.
    """
    bs = x.shape[0]
    kp, kc = jax.random.split(key)
    perm = jax.random.permutation(kp, bs).astype(jnp.int32)
    coeffs = jax.random.beta(kc, mix_beta, mix_beta, (bs,)).astype(jnp.float32)

    x_mixed = mixup_x(x, coeffs, perm)

    outputs = {
        'x': x_mixed,
        'cls_labels1': cls_labels,
        'cls_labels2': cls_labels[perm],
        'reg_labels1': reg_labels,
        'reg_labels2': reg_labels[perm],
        'cls_masks1': cls_masks,
        'cls_masks2': cls_masks[perm],
        'reg_masks1': reg_masks,
        'reg_masks2': reg_masks[perm],
        'coeffs': coeffs,
        'perm': perm,
    }
    return outputs


if __name__ == "__main__":
    key = jax.random.PRNGKey(0)
    k_x, k_cl, k_rl, k_cm, k_rm, k_fwd = jax.random.split(key, 6)

    B, C, H, W = 2, 4, 16, 16
    N_CLS, N_REG = 6, 3

    x = jax.random.normal(k_x, (B, C, H, W), dtype=jnp.float32)
    cls_labels = jax.random.uniform(k_cl, (B, N_CLS), dtype=jnp.float32)
    reg_labels = jax.random.normal(k_rl, (B, N_REG), dtype=jnp.float32)
    cls_masks = (jax.random.uniform(k_cm, (B, N_CLS)) > 0.5).astype(jnp.float32)
    reg_masks = (jax.random.uniform(k_rm, (B, N_REG)) > 0.5).astype(jnp.float32)

    outputs = separate_multi_mixup(k_fwd, x, cls_labels, reg_labels,
                                   cls_masks, reg_masks, mix_beta=0.5)
    jax.block_until_ready(outputs)

    # Reference check of the Pallas-mixed tensor against plain JAX.
    coeffs = outputs['coeffs']
    perm = outputs['perm']
    c = coeffs.reshape(-1, 1, 1, 1)
    x_ref = c * x + (1.0 - c) * x[perm]
    assert jnp.allclose(outputs['x'], x_ref, atol=1e-6, rtol=1e-6)
    assert outputs['x'].shape == (B, C, H, W)
    assert outputs['cls_labels2'].shape == (B, N_CLS)
    assert outputs['reg_masks2'].shape == (B, N_REG)

    print("KERNEL_OK")
</pallas_src>

<mosaic_0001>
module attributes {stable_mosaic.version = 11 : i64} {
  func.func @_mix_kernel(%arg0: i32, %arg1: i32, %arg2: memref<2xi32, #tpu.memory_space<smem>>, %arg3: memref<2xf32, #tpu.memory_space<smem>>, %arg4: memref<1x8x128xf32, #tpu.memory_space<vmem>>, %arg5: memref<1x8x128xf32, #tpu.memory_space<vmem>>, %arg6: memref<1x8x128xf32, #tpu.memory_space<vmem>>) attributes {dimension_semantics = [#tpu.dimension_semantics<parallel>, #tpu.dimension_semantics<parallel>], iteration_bounds = array<i64: 2, 1>, scalar_prefetch = 2 : i64, scratch_operands = 0 : i64, tpu.core_type = #tpu.core_type<tc>, window_params = [{transform_indices = @transform_0, window_bounds = array<i64: 1, 8, 128>}, {transform_indices = @transform_1, window_bounds = array<i64: 1, 8, 128>}, {transform_indices = @transform_2, window_bounds = array<i64: 1, 8, 128>}]} {
    %0 = arith.index_cast %arg0 : i32 to index
    %1 = memref.load %arg3[%0] : memref<2xf32, #tpu.memory_space<smem>>
    %c0 = arith.constant 0 : index
    %c0_0 = arith.constant 0 : index
    %c0_1 = arith.constant 0 : index
    %2 = vector.load %arg4[%c0, %c0_0, %c0_1] : memref<1x8x128xf32, #tpu.memory_space<vmem>>, vector<1x8x128xf32>
    %c0_2 = arith.constant 0 : index
    %c0_3 = arith.constant 0 : index
    %c0_4 = arith.constant 0 : index
    %3 = vector.load %arg5[%c0_2, %c0_3, %c0_4] : memref<1x8x128xf32, #tpu.memory_space<vmem>>, vector<1x8x128xf32>
    %4 = arith.subf %2, %3 : vector<1x8x128xf32>
    %5 = vector.broadcast %1 : f32 to vector<1x8x128xf32>
    %6 = arith.mulf %5, %4 : vector<1x8x128xf32>
    %7 = arith.addf %3, %6 : vector<1x8x128xf32>
    %c0_5 = arith.constant 0 : index
    %c0_6 = arith.constant 0 : index
    %c0_7 = arith.constant 0 : index
    %8 = vector.load %arg6[%c0_5, %c0_6, %c0_7] : memref<1x8x128xf32, #tpu.memory_space<vmem>>, vector<1x8x128xf32>
    tpu.vector_store %arg6[%c0_5, %c0_6, %c0_7], %7 {strides = array<i32>} : memref<1x8x128xf32, #tpu.memory_space<vmem>>, vector<1x8x128xf32>,
    return
  }
  func.func @transform_0(%arg0: i32, %arg1: i32, %arg2: memref<2xi32, #tpu.memory_space<smem>>, %arg3: memref<2xf32, #tpu.memory_space<smem>>) -> (i32, i32, i32) {
    %c0_i32 = arith.constant 0 : i32
    %c0_i32_0 = arith.constant 0 : i32
    return %arg0, %c0_i32, %arg1 : i32, i32, i32
  }
  func.func @transform_1(%arg0: i32, %arg1: i32, %arg2: memref<2xi32, #tpu.memory_space<smem>>, %arg3: memref<2xf32, #tpu.memory_space<smem>>) -> (i32, i32, i32) {
    %0 = arith.index_cast %arg0 : i32 to index
    %1 = memref.load %arg2[%0] : memref<2xi32, #tpu.memory_space<smem>>
    %c0_i32 = arith.constant 0 : i32
    %c0_i32_0 = arith.constant 0 : i32
    return %1, %c0_i32, %arg1 : i32, i32, i32
  }
  func.func @transform_2(%arg0: i32, %arg1: i32, %arg2: memref<2xi32, #tpu.memory_space<smem>>, %arg3: memref<2xf32, #tpu.memory_space<smem>>) -> (i32, i32, i32) {
    %c0_i32 = arith.constant 0 : i32
    %c0_i32_0 = arith.constant 0 : i32
    return %arg0, %c0_i32, %arg1 : i32, i32, i32
  }
}

</mosaic_0001>

<llo_original>
// kernel: tpu_custom_call.1
$region0: #{tpu_custom_call.1}
  #allocation0 [shape = 'u32[]', space=smem, size = 0x4, offset = 0x4, fixed_abs, tag = 'smem constant byte address 0x4 - core index']
  #allocation1 [shape = 'u32[144,128]{1,0:T(1,128)}', space=vmem, size = 0x12000, scoped, tag = 'internal scratch']
  #allocation2 [shape = 's32[1]{0}', space=sflag, size = 0x4, scoped, tag = 'scoped memory for tpu_custom_call.1']
  #allocation3 [shape = 'u8[512]{0}', space=smem, size = 0x200, scoped, tag = 'prefetched SMEM operand 0']
  #allocation4 [shape = 'u8[512]{0}', space=smem, size = 0x200, scoped, tag = 'prefetched SMEM operand 1']
  %s0 = inlined_call_operand.hbm [shape: s32[2], index: 0, kind: input, shape index: {}]
  %s1 = inlined_call_operand.vmem [shape: f32[2], index: 1, kind: input, shape index: {}]
  %s2 = inlined_call_operand.hbm [shape: f32[2,8,128], index: 2, kind: input, shape index: {}]
  %s3 = inlined_call_operand.hbm [shape: f32[2,8,128], index: 3, kind: input, shape index: {}]
  %s4 = inlined_call_operand.hbm [shape: f32[2,8,128], index: 4, kind: output, shape index: {}]
  %s5 = sld [smem:[#allocation0]]
  $region49: #{tpu_custom_call.1} parent=0
    _
  %s7 = ssub.s32 1, %s5
  %s8 = scalar_select 0, %s7, %s5
  %10 = dma.hbm_to_smem %s0, 16, [#allocation3], [#allocation2]
  %s11 = sshll.u32 %s1, 4
  %s12 = int_to_ptr.vmem [resolvable:$true] %s11
  %14 = dma.vmem_to_smem %s12, 16, [#allocation4], [#allocation2]
  %15 = dma.done [#allocation2], 32
  %16 = sfence
  $region1: #{tpu_custom_call.1} parent=0
    #allocation5 [shape = 'u8[8192]{0}', space=vmem, size = 0x2000, scoped, tag = 'input window, operand 2']
    #allocation6 [shape = 's32[2]{0}', space=sflag, size = 0x8, scoped, tag = 'scoped memory for tpu_custom_call.1']
    #allocation7 [shape = 's32[2]{0}', space=sflag, size = 0x8, scoped, tag = 'scoped memory for tpu_custom_call.1']
    #allocation8 [shape = 'u8[8192]{0}', space=vmem, size = 0x2000, scoped, tag = 'input window, operand 3']
    #allocation9 [shape = 's32[2]{0}', space=sflag, size = 0x8, scoped, tag = 'scoped memory for tpu_custom_call.1']
    #allocation10 [shape = 'u8[8192]{0}', space=vmem, size = 0x2000, scoped, tag = 'output window, operand 0']
    %17 = vsyncpa [#allocation6], 0
    %s18 = scalar_lea.sflag [#allocation6], 1
    %19 = vsyncpa %s18, 0
    %20 = vsyncpa [#allocation9], 0
    %s21 = scalar_lea.sflag [#allocation9], 1
    %22 = vsyncpa %s21, 0
    %23 = vsyncpa [#allocation7], 0
    %s24 = scalar_lea.sflag [#allocation7], 1
    %25 = vsyncpa %s24, 0
    loop: start=0, step=1, limit=4
    $region2: #{tpu_custom_call.1} parent=1 // loop_pre_header
      _
    $region3: #{tpu_custom_call.1} parent=1 // loop_header
      %s27 = sphi 0, %s31
      %p28 = scmp.ge.s32.totalorder %s27, 4
      %s34 = sphi 0, %s46
      %s35 = sphi 0, %s42
      %s36 = sphi 0, %s34
      %s37 = sphi 0, %s35
      %s38 = sphi 0, %s36
      %s39 = sphi 0, %s37
      %s51 = sphi 0, %s53
      %s54 = sphi 0, %s51
      %s55 = sphi 0, %s54
      %s71 = sphi 0, %s55
      %s81 = sphi 0, %s83
      %s84 = sphi 0, %s81
      %s85 = sphi 0, %s84
      %s101 = sphi 0, %s85
      %s109 = sphi 0, %s111
      %s112 = sphi 0, %s109
      %s113 = sphi 0, %s112
      %s129 = sphi 0, %s113
    $region4: #{tpu_custom_call.1} parent=1 // loop_header_branch
      %30 = sbr.rel (%p28) target = $region8
    $region5: #{tpu_custom_call.1} parent=1 // loop_body
      %s32 = ssub.s32 %s27, 1
      %s33 = ssub.s32 %s27, 2
      %s40 = sadd.s32 1, %s35
      %p41 = scmp.ge.s32.totalorder %s40, 1
      %s42 = scalar_select %p41, 0, %s40
      %s43 = sadd.s32 1, %s34
      %s44 = scalar_select %p41, %s43, %s34
      %p45 = scmp.ge.s32.totalorder %s44, 2
      %s46 = scalar_select %p45, 0, %s44
      %s47 = ssub.s32 %s34, %s46
      %s48 = ssub.s32 %s35, %s42
      %s49 = sor.u32 %s47, %s48
      %p50 = scmp.eq.s32.totalorder %s49, 0
      %s52 = sadd.s32 %s51, 1
      %s53 = scalar_select %p50, %s51, %s52
      %p56 = pneg %p50
      %p57 = scmp.eq.s32.totalorder %s27, 1
      %p58 = por %p56, %p57
      %p59 = scmp.ne.s32.totalorder %s51, %s54
      %p60 = scmp.eq.s32.totalorder %s27, 0
      %p61 = por %p59, %p60
      %p62 = scmp.ne.s32.totalorder %s51, %s54
      %p63 = scmp.eq.s32.totalorder %s32, 1
      %p64 = por %p62, %p63
      %p65 = scmp.ne.s32.totalorder %s54, %s55
      %p66 = scmp.eq.s32.totalorder %s32, 0
      %p67 = por %p65, %p66
      %p68 = scmp.ne.s32.totalorder %s54, %s55
      %p69 = scmp.eq.s32.totalorder %s33, 1
      %p70 = por %p68, %p69
      %p72 = scmp.ne.s32.totalorder %s55, %s71
      %p73 = scmp.eq.s32.totalorder %s33, 0
      %p74 = por %p72, %p73
      %s75 = sld [smem:[#allocation3 + %s34]]
      %s76 = sld [smem:[#allocation3 + %s46]]
      %s77 = ssub.s32 %s75, %s76
      %s78 = ssub.s32 %s35, %s42
      %s79 = sor.u32 %s77, %s78
      %p80 = scmp.eq.s32.totalorder %s79, 0
      %s82 = sadd.s32 %s81, 1
      %s83 = scalar_select %p80, %s81, %s82
      %p86 = pneg %p80
      %p87 = scmp.eq.s32.totalorder %s27, 1
      %p88 = por %p86, %p87
      %p89 = scmp.ne.s32.totalorder %s81, %s84
      %p90 = scmp.eq.s32.totalorder %s27, 0
      %p91 = por %p89, %p90
      %p92 = scmp.ne.s32.totalorder %s81, %s84
      %p93 = scmp.eq.s32.totalorder %s32, 1
      %p94 = por %p92, %p93
      %p95 = scmp.ne.s32.totalorder %s84, %s85
      %p96 = scmp.eq.s32.totalorder %s32, 0
      %p97 = por %p95, %p96
      %p98 = scmp.ne.s32.totalorder %s84, %s85
      %p99 = scmp.eq.s32.totalorder %s33, 1
      %p100 = por %p98, %p99
      %p102 = scmp.ne.s32.totalorder %s85, %s101
      %p103 = scmp.eq.s32.totalorder %s33, 0
      %p104 = por %p102, %p103
      %s105 = ssub.s32 %s34, %s46
      %s106 = ssub.s32 %s35, %s42
      %s107 = sor.u32 %s105, %s106
      %p108 = scmp.eq.s32.totalorder %s107, 0
      %s110 = sadd.s32 %s109, 1
      %s111 = scalar_select %p108, %s109, %s110
      %p114 = pneg %p108
      %p115 = scmp.eq.s32.totalorder %s27, 1
      %p116 = por %p114, %p115
      %p117 = scmp.ne.s32.totalorder %s109, %s112
      %p118 = scmp.eq.s32.totalorder %s27, 0
      %p119 = por %p117, %p118
      %p120 = scmp.ne.s32.totalorder %s109, %s112
      %p121 = scmp.eq.s32.totalorder %s32, 1
      %p122 = por %p120, %p121
      %p123 = scmp.ne.s32.totalorder %s112, %s113
      %p124 = scmp.eq.s32.totalorder %s32, 0
      %p125 = por %p123, %p124
      %p126 = scmp.ne.s32.totalorder %s112, %s113
      %p127 = scmp.eq.s32.totalorder %s33, 1
      %p128 = por %p126, %p127
      %p130 = scmp.ne.s32.totalorder %s113, %s129
      %p131 = scmp.eq.s32.totalorder %s33, 0
      %p132 = por %p130, %p131
      %p133 = scmp.le.s32.totalorder 1, %s27
      %p134 = scmp.lt.s32.totalorder %s27, 3
      %p135 = pnand %p133, %p134
      %p136 = pneg %p135
      // Predicated region
      $region9: #{tpu_custom_call.1} parent=5 // pred_check
        _
      $region10: #{tpu_custom_call.1} parent=5 // pred_check_branch
        %138 = sbr.rel (%p135) target = $region12
      $region11: #{tpu_custom_call.1} parent=5 // pred_region
        %s139 = ssub.s32 %s27, 1
      $region12: #{tpu_custom_call.1} parent=5 // pred_fallthru
        _
      %p140 = scmp.lt.s32.totalorder %s27, 2
      // Predicated region
      $region13: #{tpu_custom_call.1} parent=5 // pred_check
        %p141 = pneg %p140
      $region14: #{tpu_custom_call.1} parent=5 // pred_check_branch
        %143 = sbr.rel (%p141) target = $region16
      $region15: #{tpu_custom_call.1} parent=5 // pred_region
        // Predicated region
        $region17: #{tpu_custom_call.1} parent=15 // pred_check
          %p144 = pneg %p61
        $region18: #{tpu_custom_call.1} parent=15 // pred_check_branch
          %146 = sbr.rel (%p144) target = $region20
        $region19: #{tpu_custom_call.1} parent=15 // pred_region
          %s147 = sand.u32 %s51, 1
          %s148 = scalar_lea.sflag [#allocation6], %s147
          %s149 = sand.u32 %s51, 1
          %s150 = smul.addr %s149, 8
          %s151 = scalar_lea.vmem [#allocation5], %s150
          %s153 = ssub.s32 128, 128
          %154 = vsyncadd %s148, %s153
          %s155 = sadd.s32 %s35, %s34
          %s156 = smul.addr %s155, 128
          %s157 = scalar_lea.hbm %s2, %s156
          %s159 = sshll.u32 %s151, 4
          %s160 = int_to_ptr.vmem [resolvable:$true] %s159
          %162 = dma.hbm_to_vmem [thread:$0]  %s157, 128, %s160, %s148
        $region20: #{tpu_custom_call.1} parent=15 // pred_fallthru
          _
        // Predicated region
        $region21: #{tpu_custom_call.1} parent=15 // pred_check
          %p163 = pneg %p91
        $region22: #{tpu_custom_call.1} parent=15 // pred_check_branch
          %165 = sbr.rel (%p163) target = $region24
        $region23: #{tpu_custom_call.1} parent=15 // pred_region
          %s166 = sand.u32 %s81, 1
          %s167 = scalar_lea.sflag [#allocation9], %s166
          %s168 = sand.u32 %s81, 1
          %s169 = smul.addr %s168, 8
          %s170 = scalar_lea.vmem [#allocation8], %s169
          %s171 = sld [smem:[#allocation3 + %s34]]
          %s173 = ssub.s32 128, 128
          %174 = vsyncadd %s167, %s173
          %s175 = sadd.s32 %s35, %s171
          %s176 = smul.addr %s175, 128
          %s177 = scalar_lea.hbm %s3, %s176
          %s179 = sshll.u32 %s170, 4
          %s180 = int_to_ptr.vmem [resolvable:$true] %s179
          %182 = dma.hbm_to_vmem [thread:$0]  %s177, 128, %s180, %s167
        $region24: #{tpu_custom_call.1} parent=15 // pred_fallthru
          _
      $region16: #{tpu_custom_call.1} parent=5 // pred_fallthru
        _
      %p183 = scmp.le.s32.totalorder 1, %s27
      %p184 = scmp.lt.s32.totalorder %s27, 3
      %p185 = pnand %p183, %p184
      %p186 = pneg %p185
      // Predicated region
      $region25: #{tpu_custom_call.1} parent=5 // pred_check
        _
      $region26: #{tpu_custom_call.1} parent=5 // pred_check_branch
        %188 = sbr.rel (%p185) target = $region28
      $region27: #{tpu_custom_call.1} parent=5 // pred_region
        %s189 = ssub.s32 %s27, 1
        %s190 = sand.u32 %s54, 1
        %s191 = scalar_lea.sflag [#allocation6], %s190
        %s192 = sand.u32 %s54, 1
        %s193 = smul.addr %s192, 8
        %s194 = scalar_lea.vmem [#allocation5], %s193
        // Predicated region
        $region29: #{tpu_custom_call.1} parent=27 // pred_check
          %p195 = pneg %p67
        $region30: #{tpu_custom_call.1} parent=27 // pred_check_branch
          %197 = sbr.rel (%p195) target = $region32
        $region31: #{tpu_custom_call.1} parent=27 // pred_region
          %198 = dma.done %s191, 128
        $region32: #{tpu_custom_call.1} parent=27 // pred_fallthru
          _
        %s199 = sand.u32 %s84, 1
        %s200 = scalar_lea.sflag [#allocation9], %s199
        %s201 = sand.u32 %s84, 1
        %s202 = smul.addr %s201, 8
        %s203 = scalar_lea.vmem [#allocation8], %s202
        // Predicated region
        $region33: #{tpu_custom_call.1} parent=27 // pred_check
          %p204 = pneg %p97
        $region34: #{tpu_custom_call.1} parent=27 // pred_check_branch
          %206 = sbr.rel (%p204) target = $region36
        $region35: #{tpu_custom_call.1} parent=27 // pred_region
          %207 = dma.done %s200, 128
        $region36: #{tpu_custom_call.1} parent=27 // pred_fallthru
          _
        %s208 = sand.u32 %s54, 1
        %s209 = scalar_lea.sflag [#allocation6], %s208
        %s210 = sand.u32 %s54, 1
        %s211 = smul.addr %s210, 8
        %s212 = scalar_lea.vmem [#allocation5], %s211
        %p213 = pneg %p67
        %p214 = pneg %p64
        %s215 = sand.u32 %s84, 1
        %s216 = scalar_lea.sflag [#allocation9], %s215
        %s217 = sand.u32 %s84, 1
        %s218 = smul.addr %s217, 8
        %s219 = scalar_lea.vmem [#allocation8], %s218
        %p220 = pneg %p97
        %p221 = pneg %p94
        %p222 = pneg %p125
        %p223 = pneg %p122
        %s224 = sand.u32 %s112, 1
        %s225 = scalar_lea.sflag [#allocation7], %s224
        %s226 = sand.u32 %s112, 1
        %s227 = smul.addr %s226, 8
        %s228 = scalar_lea.vmem [#allocation10], %s227
        %s229 = sld [smem:[#allocation3 + %s36]]
        %s230 = sld [smem:[#allocation4 + %s36]]
        %v231 = vld [vmem:[%s194] sm:$0xff]
        %v232 = vld [vmem:[%s203] sm:$0xff]
        %v233 = vsub.f32 %v231, %v232
        %v234 = vstv %s230
        %v235 = vmul.f32 %v234, %v233
        %v236 = vadd.f32 %v232, %v235
        %237 = vst [vmem:[%s228] sm:$0xff] %v236
        %s238 = sand.u32 %s112, 1
        %s239 = scalar_lea.sflag [#allocation7], %s238
        %s240 = sand.u32 %s112, 1
        %s241 = smul.addr %s240, 8
        %s242 = scalar_lea.vmem [#allocation10], %s241
        // Predicated region
        $region37: #{tpu_custom_call.1} parent=27 // pred_check
          %p243 = pneg %p122
        $region38: #{tpu_custom_call.1} parent=27 // pred_check_branch
          %245 = sbr.rel (%p243) target = $region40
        $region39: #{tpu_custom_call.1} parent=27 // pred_region
          %s247 = ssub.s32 128, 128
          %248 = vsyncadd %s239, %s247
          %s249 = sadd.s32 %s37, %s36
          %s250 = smul.addr %s249, 128
          %s251 = scalar_lea.hbm %s4, %s250
          %s253 = sshll.u32 %s242, 4
          %s254 = int_to_ptr.vmem [resolvable:$true] %s253
          %256 = dma.vmem_to_hbm [thread:$0]  %s254, 128, %s251, %s239
        $region40: #{tpu_custom_call.1} parent=27 // pred_fallthru
          _
      $region28: #{tpu_custom_call.1} parent=5 // pred_fallthru
        _
      %p257 = scmp.le.s32.totalorder 2, %s27
      // Predicated region
      $region41: #{tpu_custom_call.1} parent=5 // pred_check
        %p258 = pneg %p257
      $region42: #{tpu_custom_call.1} parent=5 // pred_check_branch
        %260 = sbr.rel (%p258) target = $region44
      $region43: #{tpu_custom_call.1} parent=5 // pred_region
        %s261 = ssub.s32 %s27, 2
        // Predicated region
        $region45: #{tpu_custom_call.1} parent=43 // pred_check
          %p262 = pneg %p128
        $region46: #{tpu_custom_call.1} parent=43 // pred_check_branch
          %264 = sbr.rel (%p262) target = $region48
        $region47: #{tpu_custom_call.1} parent=43 // pred_region
          %s265 = sand.u32 %s113, 1
          %s266 = scalar_lea.sflag [#allocation7], %s265
          %s267 = sand.u32 %s113, 1
          %s268 = smul.addr %s267, 8
          %s269 = scalar_lea.vmem [#allocation10], %s268
          %270 = dma.done %s266, 128
        $region48: #{tpu_custom_call.1} parent=43 // pred_fallthru
          _
      $region44: #{tpu_custom_call.1} parent=5 // pred_fallthru
        _
    $region6: #{tpu_custom_call.1} parent=1 // loop_footer
      %s31 = sadd.s32 1, %s27
    $region7: #{tpu_custom_call.1} parent=1 // loop_footer_branch
      %26 = sbr.rel target = $region3
    $region8: #{tpu_custom_call.1} parent=1 // loop_exit
      _
    %271 = vsyncpa [#allocation6], 1
    %s272 = scalar_lea.sflag [#allocation6], 1
    %273 = vsyncpa %s272, 1
    %274 = vsyncpa [#allocation9], 1
    %s275 = scalar_lea.sflag [#allocation9], 1
    %276 = vsyncpa %s275, 1
    %277 = vsyncpa [#allocation7], 1
    %s278 = scalar_lea.sflag [#allocation7], 1
    %279 = vsyncpa %s278, 1

</llo_original>
